<compile_context>
chip_gen: v6e
topology: v6e:2x2x1
jax: 0.10.0
libtpu: 0.0.40
codegen_flags: <defaults>
</compile_context>

<pallas_src>
import jax
import jax.numpy as jnp
from jax.experimental import pallas as pl
from jax.experimental.pallas import tpu as pltpu


LANE = 128      # lane-axis granularity (feature dims padded to this)
SUBLANE = 8     # sublane-axis granularity (batch tiles padded to this)


def _round_up(x, m):
    return (x + m - 1) // m * m


def _vmem_budget_bytes():
    """Per-chip VMEM budget with headroom for compiler scratch / spills."""
    try:
        cap = pltpu.get_tpu_info().vmem_capacity_bytes
    except Exception:
        cap = 64 * 1024 * 1024   # conservative (v7x-sized) fallback
    return int(cap * 0.85)


def _make_mlp_kernel(n_layers):
    """Fused (Linear -> ReLU) * n_layers kernel body."""

    def kernel(*refs):
        # refs = (x, w0, b0, w1, b1, ..., o)
        x_ref = refs[0]
        o_ref = refs[-1]
        cur = x_ref[...]                                        # bf16 (tm, d0_pad)
        for l in range(n_layers):
            w_ref = refs[1 + 2 * l]
            b_ref = refs[2 + 2 * l]
            y = jnp.dot(cur, w_ref[...],
                        preferred_element_type=jnp.float32)     # MXU, f32 accum
            y = jnp.maximum(y + b_ref[...], 0.0)                # bias + ReLU (VPU)
            if l < n_layers - 1:
                cur = y.astype(jnp.bfloat16)   # stays on-chip, no HBM round-trip
            else:
                o_ref[...] = y.astype(o_ref.dtype)

    return kernel


def prepare_mlp_params(params, input_dim):
    """Pad feature dims to LANE multiples and cast to MXU dtypes ONCE.

    Padding is exact: padded input cols hit zero weight rows, padded output
    cols get zero weight+bias and relu(0)==0, so zeros propagate through every
    layer.

    params: list of (w, b); w is [d_in, d_out] (pre-transposed vs nn.Linear).
    Returns (padded_params, meta) to pass to multi_layer_perceptron.
    """
    dims = [int(w.shape[1]) for w, _ in params]
    d_in_p = _round_up(input_dim, LANE)
    dims_p = [_round_up(d, LANE) for d in dims]

    padded = []
    prev, prev_p = input_dim, d_in_p
    for (w, b), d, d_p in zip(params, dims, dims_p):
        w_p = jnp.zeros((prev_p, d_p), jnp.bfloat16).at[:prev, :d].set(
            w.astype(jnp.bfloat16))
        b_p = jnp.zeros((1, d_p), jnp.float32).at[:, :d].set(
            b.reshape(1, -1).astype(jnp.float32))
        padded.append((w_p, b_p))
        prev, prev_p = d, d_p

    meta = dict(input_dim=input_dim, d_in_p=d_in_p, dims=dims, dims_p=dims_p)
    return padded, meta


def multi_layer_perceptron(x, prepared, *, block_batch=512, out_dtype=None,
                           min_batch_tiles=2):
    """Forward pass equivalent to MultiLayerPerceptron(x) in eval mode.

    x:        [B, input_dim]
    prepared: output of prepare_mlp_params (padded/cast once, reused per call).
    """
    padded_params, meta = prepared
    B, d_in = x.shape
    assert d_in == meta["input_dim"], "input_dim mismatch with prepared params"
    d_in_p, dims, dims_p = meta["d_in_p"], meta["dims"], meta["dims_p"]
    n_layers = len(padded_params)

    if out_dtype is None:
        out_dtype = x.dtype
    out_bytes = jnp.dtype(out_dtype).itemsize

    vmem_budget = _vmem_budget_bytes()

    # Resident (single-buffered) weight + bias bytes.
    w_bytes = 0
    prev_p = d_in_p
    for d_p in dims_p:
        w_bytes += prev_p * d_p * 2 + d_p * 4
        prev_p = d_p

    # Batch tile: as large as possible (amortize ~0.35us/step overhead and the
    # weight-stationary MXU RHS) but (a) <= ceil(B/min_batch_tiles) so v7x can
    # shard >=2 tiles across its 2 TensorCores, and (b) small enough that the
    # double-buffered x/out tiles + resident weights fit the VMEM budget.
    tm_cap = max(SUBLANE, _round_up(pl.cdiv(B, min_batch_tiles), SUBLANE))
    tm = min(_round_up(block_batch, SUBLANE), tm_cap)

    def _tile_bytes(t):
        act_headroom = t * max([d_in_p] + dims_p) * 4      # f32 intermediates
        return (2 * t * d_in_p * 2                          # x tile, 2 buffers
                + 2 * t * dims_p[-1] * out_bytes            # out tile, 2 buffers
                + act_headroom)

    while tm > SUBLANE and w_bytes + _tile_bytes(tm) > vmem_budget:
        tm = max(SUBLANE, _round_up(tm // 2, SUBLANE))

    B_p = _round_up(B, tm)
    grid = (B_p // tm,)

    # Pad + cast the activation (per-call; weights already prepared).
    x_p = jnp.zeros((B_p, d_in_p), jnp.bfloat16).at[:B, :d_in].set(
        x.astype(jnp.bfloat16))

    flat_args = [x_p]
    for (w_p, b_p) in padded_params:
        flat_args += [w_p, b_p]

    # Cost estimate (advisory for XLA's scheduler around the custom call).
    flops = 0
    prev_p = d_in_p
    for d_p in dims_p:
        flops += 2 * B_p * prev_p * d_p
        prev_p = d_p
    bytes_accessed = x_p.size * 2 + w_bytes + B_p * dims_p[-1] * out_bytes
    cost = pl.CostEstimate(flops=int(flops), transcendentals=0,
                           bytes_accessed=int(bytes_accessed))

    def _build_and_call(single_buffer_weights):
        kw = ({"pipeline_mode": pl.Buffered(1)}
              if single_buffer_weights else {})
        in_specs = [pl.BlockSpec((tm, d_in_p), lambda i: (i, 0))]
        prev = d_in_p
        for d_p in dims_p:
            # Constant index map -> fetched once, VMEM-resident across tiles.
            in_specs.append(pl.BlockSpec((prev, d_p), lambda i: (0, 0), **kw))
            in_specs.append(pl.BlockSpec((1, d_p), lambda i: (0, 0), **kw))
            prev = d_p
        out_spec = pl.BlockSpec((tm, dims_p[-1]), lambda i: (i, 0))

        return pl.pallas_call(
            _make_mlp_kernel(n_layers),
            out_shape=jax.ShapeDtypeStruct((B_p, dims_p[-1]), out_dtype),
            grid=grid,
            in_specs=in_specs,
            out_specs=out_spec,
            compiler_params=pltpu.CompilerParams(
                dimension_semantics=("parallel",),   # batch tiles -> 2 TCs (v7x)
                vmem_limit_bytes=vmem_budget,
            ),
            cost_estimate=cost,
        )(*flat_args)

    try:
        out_p = _build_and_call(True)    # single-buffer constant weight blocks
    except Exception:
        out_p = _build_and_call(False)   # fallback: default double buffering

    return out_p[:B, :dims[-1]]


def init_mlp_params(key, input_dim, dims, dtype=jnp.float32):
    """nn.Linear-style init; weight stored pre-transposed as [in, out]."""
    params = []
    d_in = input_dim
    for d_out in dims:
        key, kw, kb = jax.random.split(key, 3)
        bound = 1.0 / (d_in ** 0.5)
        w = jax.random.uniform(kw, (d_in, d_out), dtype, minval=-bound, maxval=bound)
        b = jax.random.uniform(kb, (d_out,), dtype, minval=-bound, maxval=bound)
        params.append((w, b))
        d_in = d_out
    return params


if __name__ == "__main__":
    key = jax.random.PRNGKey(0)
    batch = 8
    input_dim = 32
    dims = (64, 32)          # MLP hidden dims
    dropout = 0.2            # identity at inference

    key, kx, kp = jax.random.split(key, 3)
    x = jax.random.normal(kx, (batch, input_dim), jnp.float32)
    params = init_mlp_params(kp, input_dim, dims)

    prepared = prepare_mlp_params(params, input_dim)   # pad/cast once
    out = multi_layer_perceptron(x, prepared)
    jax.block_until_ready(out)
    assert out.shape == (batch, dims[-1]), out.shape

    # Reference mimicking the kernel's numerics (bf16 operands, f32 accumulate,
    # bf16 inter-layer activations, final ReLU as in the PyTorch module).
    ref = x.astype(jnp.bfloat16).astype(jnp.float32)
    for idx, (w, b) in enumerate(params):
        w32 = w.astype(jnp.bfloat16).astype(jnp.float32)
        y = jnp.dot(ref, w32, precision=jax.lax.Precision.HIGHEST) + b.reshape(1, -1)
        y = jnp.maximum(y, 0.0)
        ref = y if idx == len(params) - 1 else y.astype(jnp.bfloat16).astype(jnp.float32)
    ref = ref.astype(out.dtype)

    assert jnp.allclose(out, ref, atol=2e-2, rtol=2e-2), (
        f"max abs err {jnp.max(jnp.abs(out - ref))}")

    print("KERNEL_OK")
</pallas_src>

<mosaic_0001>
module attributes {stable_mosaic.version = 11 : i64} {
  func.func @kernel(%arg0: i32, %arg1: memref<8x128xbf16, #tpu.memory_space<vmem>>, %arg2: memref<128x128xbf16, #tpu.memory_space<vmem>>, %arg3: memref<1x128xf32, #tpu.memory_space<vmem>>, %arg4: memref<128x128xbf16, #tpu.memory_space<vmem>>, %arg5: memref<1x128xf32, #tpu.memory_space<vmem>>, %arg6: memref<8x128xf32, #tpu.memory_space<vmem>>) attributes {dimension_semantics = [#tpu.dimension_semantics<parallel>], iteration_bounds = array<i64: 1>, scalar_prefetch = 0 : i64, scratch_operands = 0 : i64, tpu.core_type = #tpu.core_type<tc>, window_params = [{transform_indices = @transform_0, window_bounds = array<i64: 8, 128>}, {pipeline_mode = #tpu.pipeline_mode<synchronous>, transform_indices = @transform_1, window_bounds = array<i64: 128, 128>}, {pipeline_mode = #tpu.pipeline_mode<synchronous>, transform_indices = @transform_2, window_bounds = array<i64: 1, 128>}, {pipeline_mode = #tpu.pipeline_mode<synchronous>, transform_indices = @transform_3, window_bounds = array<i64: 128, 128>}, {pipeline_mode = #tpu.pipeline_mode<synchronous>, transform_indices = @transform_4, window_bounds = array<i64: 1, 128>}, {transform_indices = @transform_5, window_bounds = array<i64: 8, 128>}]} {
    %c0 = arith.constant 0 : index
    %c0_0 = arith.constant 0 : index
    %0 = vector.load %arg1[%c0, %c0_0] : memref<8x128xbf16, #tpu.memory_space<vmem>>, vector<8x128xbf16>
    %c0_1 = arith.constant 0 : index
    %c0_2 = arith.constant 0 : index
    %1 = vector.load %arg2[%c0_1, %c0_2] : memref<128x128xbf16, #tpu.memory_space<vmem>>, vector<128x128xbf16>
    %cst = arith.constant dense<0.000000e+00> : vector<8x128xf32>
    %2 = tpu.matmul %0, %1, %cst {dimension_numbers = #tpu.dot_dimension_numbers<[1], [0], [0], [1], [0, 0, 1, 1], [], []>} : vector<8x128xbf16>, vector<128x128xbf16>, vector<8x128xf32> -> vector<8x128xf32>
    %c0_3 = arith.constant 0 : index
    %c0_4 = arith.constant 0 : index
    %3 = vector.load %arg3[%c0_3, %c0_4] : memref<1x128xf32, #tpu.memory_space<vmem>>, vector<1x128xf32>
    %4 = vector.broadcast %3 : vector<1x128xf32> to vector<8x128xf32>
    %5 = arith.addf %2, %4 : vector<8x128xf32>
    %cst_5 = arith.constant 0.000000e+00 : f32
    %6 = vector.broadcast %cst_5 : f32 to vector<8x128xf32>
    %7 = arith.maximumf %5, %6 : vector<8x128xf32>
    %8 = arith.truncf %7 : vector<8x128xf32> to vector<8x128xbf16>
    %c0_6 = arith.constant 0 : index
    %c0_7 = arith.constant 0 : index
    %9 = vector.load %arg4[%c0_6, %c0_7] : memref<128x128xbf16, #tpu.memory_space<vmem>>, vector<128x128xbf16>
    %cst_8 = arith.constant dense<0.000000e+00> : vector<8x128xf32>
    %10 = tpu.matmul %8, %9, %cst_8 {dimension_numbers = #tpu.dot_dimension_numbers<[1], [0], [0], [1], [0, 0, 1, 1], [], []>} : vector<8x128xbf16>, vector<128x128xbf16>, vector<8x128xf32> -> vector<8x128xf32>
    %c0_9 = arith.constant 0 : index
    %c0_10 = arith.constant 0 : index
    %11 = vector.load %arg5[%c0_9, %c0_10] : memref<1x128xf32, #tpu.memory_space<vmem>>, vector<1x128xf32>
    %12 = vector.broadcast %11 : vector<1x128xf32> to vector<8x128xf32>
    %13 = arith.addf %10, %12 : vector<8x128xf32>
    %cst_11 = arith.constant 0.000000e+00 : f32
    %14 = vector.broadcast %cst_11 : f32 to vector<8x128xf32>
    %15 = arith.maximumf %13, %14 : vector<8x128xf32>
    %c0_12 = arith.constant 0 : index
    %c0_13 = arith.constant 0 : index
    %16 = vector.load %arg6[%c0_12, %c0_13] : memref<8x128xf32, #tpu.memory_space<vmem>>, vector<8x128xf32>
    tpu.vector_store %arg6[%c0_12, %c0_13], %15 {strides = array<i32>} : memref<8x128xf32, #tpu.memory_space<vmem>>, vector<8x128xf32>,
    return
  }
  func.func @transform_0(%arg0: i32) -> (i32, i32) {
    %c0_i32 = arith.constant 0 : i32
    %c0_i32_0 = arith.constant 0 : i32
    return %arg0, %c0_i32 : i32, i32
  }
  func.func @transform_1(%arg0: i32) -> (i32, i32) {
    %c0_i32 = arith.constant 0 : i32
    %c0_i32_0 = arith.constant 0 : i32
    %c0_i32_1 = arith.constant 0 : i32
    return %c0_i32, %c0_i32_0 : i32, i32
  }
  func.func @transform_2(%arg0: i32) -> (i32, i32) {
    %c0_i32 = arith.constant 0 : i32
    %c0_i32_0 = arith.constant 0 : i32
    %c0_i32_1 = arith.constant 0 : i32
    return %c0_i32, %c0_i32_0 : i32, i32
  }
  func.func @transform_3(%arg0: i32) -> (i32, i32) {
    %c0_i32 = arith.constant 0 : i32
    %c0_i32_0 = arith.constant 0 : i32
    %c0_i32_1 = arith.constant 0 : i32
    return %c0_i32, %c0_i32_0 : i32, i32
  }
  func.func @transform_4(%arg0: i32) -> (i32, i32) {
    %c0_i32 = arith.constant 0 : i32
    %c0_i32_0 = arith.constant 0 : i32
    %c0_i32_1 = arith.constant 0 : i32
    return %c0_i32, %c0_i32_0 : i32, i32
  }
  func.func @transform_5(%arg0: i32) -> (i32, i32) {
    %c0_i32 = arith.constant 0 : i32
    %c0_i32_0 = arith.constant 0 : i32
    return %arg0, %c0_i32 : i32, i32
  }
}

module attributes {stable_mosaic.version = 11 : i64} {
  func.func @kernel(%arg0: i32, %arg1: memref<8x128xbf16, #tpu.memory_space<vmem>>, %arg2: memref<128x128xbf16, #tpu.memory_space<vmem>>, %arg3: memref<1x128xf32, #tpu.memory_space<vmem>>, %arg4: memref<128x128xbf16, #tpu.memory_space<vmem>>, %arg5: memref<1x128xf32, #tpu.memory_space<vmem>>, %arg6: memref<8x128xf32, #tpu.memory_space<vmem>>) attributes {dimension_semantics = [#tpu.dimension_semantics<parallel>], iteration_bounds = array<i64: 1>, scalar_prefetch = 0 : i64, scratch_operands = 0 : i64, tpu.core_type = #tpu.core_type<tc>, window_params = [{transform_indices = @transform_0, window_bounds = array<i64: 8, 128>}, {pipeline_mode = #tpu.pipeline_mode<synchronous>, transform_indices = @transform_1, window_bounds = array<i64: 128, 128>}, {pipeline_mode = #tpu.pipeline_mode<synchronous>, transform_indices = @transform_2, window_bounds = array<i64: 1, 128>}, {pipeline_mode = #tpu.pipeline_mode<synchronous>, transform_indices = @transform_3, window_bounds = array<i64: 128, 128>}, {pipeline_mode = #tpu.pipeline_mode<synchronous>, transform_indices = @transform_4, window_bounds = array<i64: 1, 128>}, {transform_indices = @transform_5, window_bounds = array<i64: 8, 128>}]} {
    %c0 = arith.constant 0 : index
    %c0_0 = arith.constant 0 : index
    %0 = vector.load %arg1[%c0, %c0_0] : memref<8x128xbf16, #tpu.memory_space<vmem>>, vector<8x128xbf16>
    %c0_1 = arith.constant 0 : index
    %c0_2 = arith.constant 0 : index
    %1 = vector.load %arg2[%c0_1, %c0_2] : memref<128x128xbf16, #tpu.memory_space<vmem>>, vector<128x128xbf16>
    %cst = arith.constant dense<0.000000e+00> : vector<8x128xf32>
    %2 = tpu.matmul %0, %1, %cst {dimension_numbers = #tpu.dot_dimension_numbers<[1], [0], [0], [1], [0, 0, 1, 1], [], []>} : vector<8x128xbf16>, vector<128x128xbf16>, vector<8x128xf32> -> vector<8x128xf32>
    %c0_3 = arith.constant 0 : index
    %c0_4 = arith.constant 0 : index
    %3 = vector.load %arg3[%c0_3, %c0_4] : memref<1x128xf32, #tpu.memory_space<vmem>>, vector<1x128xf32>
    %4 = vector.broadcast %3 : vector<1x128xf32> to vector<8x128xf32>
    %5 = arith.addf %2, %4 : vector<8x128xf32>
    %cst_5 = arith.constant 0.000000e+00 : f32
    %6 = vector.broadcast %cst_5 : f32 to vector<8x128xf32>
    %7 = arith.maximumf %5, %6 : vector<8x128xf32>
    %8 = arith.truncf %7 : vector<8x128xf32> to vector<8x128xbf16>
    %c0_6 = arith.constant 0 : index
    %c0_7 = arith.constant 0 : index
    %9 = vector.load %arg4[%c0_6, %c0_7] : memref<128x128xbf16, #tpu.memory_space<vmem>>, vector<128x128xbf16>
    %cst_8 = arith.constant dense<0.000000e+00> : vector<8x128xf32>
    %10 = tpu.matmul %8, %9, %cst_8 {dimension_numbers = #tpu.dot_dimension_numbers<[1], [0], [0], [1], [0, 0, 1, 1], [], []>} : vector<8x128xbf16>, vector<128x128xbf16>, vector<8x128xf32> -> vector<8x128xf32>
    %c0_9 = arith.constant 0 : index
    %c0_10 = arith.constant 0 : index
    %11 = vector.load %arg5[%c0_9, %c0_10] : memref<1x128xf32, #tpu.memory_space<vmem>>, vector<1x128xf32>
    %12 = vector.broadcast %11 : vector<1x128xf32> to vector<8x128xf32>
    %13 = arith.addf %10, %12 : vector<8x128xf32>
    %cst_11 = arith.constant 0.000000e+00 : f32
    %14 = vector.broadcast %cst_11 : f32 to vector<8x128xf32>
    %15 = arith.maximumf %13, %14 : vector<8x128xf32>
    %c0_12 = arith.constant 0 : index
    %c0_13 = arith.constant 0 : index
    %16 = vector.load %arg6[%c0_12, %c0_13] : memref<8x128xf32, #tpu.memory_space<vmem>>, vector<8x128xf32>
    tpu.vector_store %arg6[%c0_12, %c0_13], %15 {strides = array<i32>} : memref<8x128xf32, #tpu.memory_space<vmem>>, vector<8x128xf32>,
    return
  }
  func.func @transform_0(%arg0: i32) -> (i32, i32) {
    %c0_i32 = arith.constant 0 : i32
    %c0_i32_0 = arith.constant 0 : i32
    return %arg0, %c0_i32 : i32, i32
  }
  func.func @transform_1(%arg0: i32) -> (i32, i32) {
    %c0_i32 = arith.constant 0 : i32
    %c0_i32_0 = arith.constant 0 : i32
    %c0_i32_1 = arith.constant 0 : i32
    return %c0_i32, %c0_i32_0 : i32, i32
  }
  func.func @transform_2(%arg0: i32) -> (i32, i32) {
    %c0_i32 = arith.constant 0 : i32
    %c0_i32_0 = arith.constant 0 : i32
    %c0_i32_1 = arith.constant 0 : i32
    return %c0_i32, %c0_i32_0 : i32, i32
  }
  func.func @transform_3(%arg0: i32) -> (i32, i32) {
    %c0_i32 = arith.constant 0 : i32
    %c0_i32_0 = arith.constant 0 : i32
    %c0_i32_1 = arith.constant 0 : i32
    return %c0_i32, %c0_i32_0 : i32, i32
  }
  func.func @transform_4(%arg0: i32) -> (i32, i32) {
    %c0_i32 = arith.constant 0 : i32
    %c0_i32_0 = arith.constant 0 : i32
    %c0_i32_1 = arith.constant 0 : i32
    return %c0_i32, %c0_i32_0 : i32, i32
  }
  func.func @transform_5(%arg0: i32) -> (i32, i32) {
    %c0_i32 = arith.constant 0 : i32
    %c0_i32_0 = arith.constant 0 : i32
    return %arg0, %c0_i32 : i32, i32
  }
}

</mosaic_0001>

<llo_original>
// kernel: tpu_custom_call.1
$region0: #{tpu_custom_call.1}
  #allocation0 [shape = 'u32[]', space=smem, size = 0x4, offset = 0x4, fixed_abs, tag = 'smem constant byte address 0x4 - core index']
  #allocation1 [shape = 'u32[144,128]{1,0:T(1,128)}', space=vmem, size = 0x12000, scoped, tag = 'internal scratch']
  %s0 = inlined_call_operand.hbm [shape: bf16[8,128], index: 0, kind: input, shape index: {}]
  %s1 = inlined_call_operand.hbm [shape: bf16[128,128], index: 1, kind: input, shape index: {}]
  %s2 = inlined_call_operand.vmem [shape: f32[1,128], index: 2, kind: input, shape index: {}]
  %s3 = inlined_call_operand.hbm [shape: bf16[128,128], index: 3, kind: input, shape index: {}]
  %s4 = inlined_call_operand.vmem [shape: f32[1,128], index: 4, kind: input, shape index: {}]
  %s5 = inlined_call_operand.hbm [shape: f32[8,128], index: 5, kind: output, shape index: {}]
  %s6 = sld [smem:[#allocation0]]
  $region42: #{tpu_custom_call.1} parent=0
    _
  %s8 = ssub.s32 1, %s6
  %s9 = scalar_select 0, %s8, %s6
  $region1: #{tpu_custom_call.1} parent=0
    #allocation2 [shape = 'u8[2048]{0}', space=vmem, size = 0x800, scoped, tag = 'input window, operand 0, single buffered']
    #allocation3 [shape = 's32[1]{0}', space=sflag, size = 0x4, scoped, tag = 'scoped memory for tpu_custom_call.1']
    #allocation4 [shape = 's32[1]{0}', space=sflag, size = 0x4, scoped, tag = 'scoped memory for tpu_custom_call.1']
    #allocation5 [shape = 'u8[32768]{0}', space=vmem, size = 0x8000, scoped, tag = 'input window, operand 1, single buffered']
    #allocation6 [shape = 's32[1]{0}', space=sflag, size = 0x4, scoped, tag = 'scoped memory for tpu_custom_call.1']
    #allocation7 [shape = 'u8[32768]{0}', space=vmem, size = 0x8000, scoped, tag = 'input window, operand 3, single buffered']
    #allocation8 [shape = 'u8[4096]{0}', space=vmem, size = 0x1000, scoped, tag = 'output window, operand 0, single buffered']
    %10 = vsyncpa [#allocation3], 0
    %11 = vsyncpa [#allocation6], 0
    %12 = vsyncpa [#allocation4], 0
    // Predicated region
    $region2: #{tpu_custom_call.1} parent=1 // pred_check
      _
    $region3: #{tpu_custom_call.1} parent=1 // pred_check_branch
      %14 = sbr.rel (0) target = $region5
    $region4: #{tpu_custom_call.1} parent=1 // pred_region
      %s16 = ssub.s32 64, 64
      %17 = vsyncadd [#allocation3], %s16
      %s19 = sshll.u32 [#allocation2], 4
      %s20 = int_to_ptr.vmem [resolvable:$true] %s19
      %22 = dma.hbm_to_vmem [thread:$0]  %s0, 64, %s20, [#allocation3]
    $region5: #{tpu_custom_call.1} parent=1 // pred_fallthru
      _
    // Predicated region
    $region6: #{tpu_custom_call.1} parent=1 // pred_check
      _
    $region7: #{tpu_custom_call.1} parent=1 // pred_check_branch
      %24 = sbr.rel (0) target = $region9
    $region8: #{tpu_custom_call.1} parent=1 // pred_region
      %s26 = ssub.s32 1024, 1024
      %27 = vsyncadd [#allocation6], %s26
      %s28 = sshll.u32 [#allocation5], 4
      %s29 = int_to_ptr.vmem [resolvable:$true] %s28
      %34 = dma.hbm_to_vmem [thread:$0]  %s1, 1024, %s29, [#allocation6], 64, 64, 4
    $region9: #{tpu_custom_call.1} parent=1 // pred_fallthru
      _
    // Predicated region
    $region10: #{tpu_custom_call.1} parent=1 // pred_check
      _
    $region11: #{tpu_custom_call.1} parent=1 // pred_check_branch
      %36 = sbr.rel (0) target = $region13
    $region12: #{tpu_custom_call.1} parent=1 // pred_region
      _
    $region13: #{tpu_custom_call.1} parent=1 // pred_fallthru
      _
    // Predicated region
    $region14: #{tpu_custom_call.1} parent=1 // pred_check
      _
    $region15: #{tpu_custom_call.1} parent=1 // pred_check_branch
      %38 = sbr.rel (0) target = $region17
    $region16: #{tpu_custom_call.1} parent=1 // pred_region
      %s40 = ssub.s32 1024, 1024
      %41 = vsyncadd [#allocation6], %s40
      %s42 = sshll.u32 [#allocation7], 4
      %s43 = int_to_ptr.vmem [resolvable:$true] %s42
      %48 = dma.hbm_to_vmem [thread:$0]  %s3, 1024, %s43, [#allocation6], 64, 64, 4
    $region17: #{tpu_custom_call.1} parent=1 // pred_fallthru
      _
    // Predicated region
    $region18: #{tpu_custom_call.1} parent=1 // pred_check
      _
    $region19: #{tpu_custom_call.1} parent=1 // pred_check_branch
      %50 = sbr.rel (0) target = $region21
    $region20: #{tpu_custom_call.1} parent=1 // pred_region
      _
    $region21: #{tpu_custom_call.1} parent=1 // pred_fallthru
      _
    // Predicated region
    $region22: #{tpu_custom_call.1} parent=1 // pred_check
      _
    $region23: #{tpu_custom_call.1} parent=1 // pred_check_branch
      %52 = sbr.rel (0) target = $region25
    $region24: #{tpu_custom_call.1} parent=1 // pred_region
      %53 = dma.done [#allocation3], 64
    $region25: #{tpu_custom_call.1} parent=1 // pred_fallthru
      _
    // Predicated region
    $region26: #{tpu_custom_call.1} parent=1 // pred_check
      _
    $region27: #{tpu_custom_call.1} parent=1 // pred_check_branch
      %55 = sbr.rel (0) target = $region29
    $region28: #{tpu_custom_call.1} parent=1 // pred_region
      %56 = dma.done [#allocation6], 1024
    $region29: #{tpu_custom_call.1} parent=1 // pred_fallthru
      _
    // Predicated region
    $region30: #{tpu_custom_call.1} parent=1 // pred_check
      _
    $region31: #{tpu_custom_call.1} parent=1 // pred_check_branch
      %58 = sbr.rel (0) target = $region33
    $region32: #{tpu_custom_call.1} parent=1 // pred_region
      %59 = dma.done [#allocation6], 1024
    $region33: #{tpu_custom_call.1} parent=1 // pred_fallthru
      _
    %v61 = vld [vmem:[#allocation2] sm:$0xf]
    %v62 = vld [vmem:[#allocation5] sm:$0xf]
    %v63 = vld [vmem:[#allocation5 + $0x4] sm:$0xf]
    %v64 = vld [vmem:[#allocation5 + $0x8] sm:$0xf]
    %v65 = vld [vmem:[#allocation5 + $0xc] sm:$0xf]
    %v66 = vld [vmem:[#allocation5 + $0x10] sm:$0xf]
    %v67 = vld [vmem:[#allocation5 + $0x14] sm:$0xf]
    %v68 = vld [vmem:[#allocation5 + $0x18] sm:$0xf]
    %v69 = vld [vmem:[#allocation5 + $0x1c] sm:$0xf]
    %v70 = vld [vmem:[#allocation5 + $0x20] sm:$0xf]
    %v71 = vld [vmem:[#allocation5 + $0x24] sm:$0xf]
    %v72 = vld [vmem:[#allocation5 + $0x28] sm:$0xf]
    %v73 = vld [vmem:[#allocation5 + $0x2c] sm:$0xf]
    %v74 = vld [vmem:[#allocation5 + $0x30] sm:$0xf]
    %v75 = vld [vmem:[#allocation5 + $0x34] sm:$0xf]
    %v76 = vld [vmem:[#allocation5 + $0x38] sm:$0xf]
    %v77 = vld [vmem:[#allocation5 + $0x3c] sm:$0xf]
    %v78 = vld [vmem:[%s2] sm:$0x1]
    %v80 = vlaneseq
    %v81 = vshrl.u32 %v80, 7
    %v82 = vsub.s32 0, %v81
    %v83 = vrot.slane %v78, %v82
    %v101 = vunpack.c.l.b16 %v62
    %v102 = vunpack.c.l.b16 %v63
    %v103 = vunpack.c.l.b16 %v64
    %v104 = vunpack.c.l.b16 %v65
    %v105 = vunpack.c.l.b16 %v66
    %v106 = vunpack.c.l.b16 %v67
    %v107 = vunpack.c.l.b16 %v68
    %v108 = vunpack.c.l.b16 %v69
    %v109 = vunpack.c.l.b16 %v70
    %v110 = vunpack.c.l.b16 %v71
    %v111 = vunpack.c.l.b16 %v72
    %v112 = vunpack.c.l.b16 %v73
    %v113 = vunpack.c.l.b16 %v74
    %v114 = vunpack.c.l.b16 %v75
    %v115 = vunpack.c.l.b16 %v76
    %v116 = vunpack.c.l.b16 %v77
    %v117 = vpack.c.b16 %v102, %v101
    %v118 = vpack.c.b16 %v104, %v103
    %v119 = vpack.c.b16 %v106, %v105
    %v120 = vpack.c.b16 %v108, %v107
    %v121 = vpack.c.b16 %v110, %v109
    %v122 = vpack.c.b16 %v112, %v111
    %v123 = vpack.c.b16 %v114, %v113
    %v124 = vpack.c.b16 %v116, %v115
    %133 = vmatprep.subr.bf16.mxu0 0
    %134 = vmatpush1.bf16.msra.mxu0 %v124
    %135 = vmatprep.subr.bf16.mxu0 0
    %136 = vmatpush1.bf16.msra.mxu0 %v123
    %137 = vmatprep.subr.bf16.mxu0 0
    %138 = vmatpush1.bf16.msra.mxu0 %v122
    %139 = vmatprep.subr.bf16.mxu0 0
    %140 = vmatpush1.bf16.msra.mxu0 %v121
    %141 = vmatprep.subr.bf16.mxu0 0
    %142 = vmatpush1.bf16.msra.mxu0 %v120
    %143 = vmatprep.subr.bf16.mxu0 0
    %144 = vmatpush1.bf16.msra.mxu0 %v119
    %145 = vmatprep.subr.bf16.mxu0 0
    %146 = vmatpush1.bf16.msra.mxu0 %v118
    %147 = vmatprep.subr.bf16.mxu0 0
    %148 = vmatpush1.bf16.msra.mxu0 %v117
    %149 = vmatprep.subr.bf16.mxu0 0
    %150 = vmatpush2.bf16.msra.mxu0 0
    %151 = vmatprep.subr.bf16.mxu0 0
    %152 = vmatpush2.bf16.msra.mxu0 0
    %153 = vmatprep.subr.bf16.mxu0 0
    %154 = vmatpush2.bf16.msra.mxu0 0
    %155 = vmatprep.subr.bf16.mxu0 0
    %156 = vmatpush2.bf16.msra.mxu0 0
    %157 = vmatprep.subr.bf16.mxu0 0
    %158 = vmatpush2.bf16.msra.mxu0 0
    %159 = vmatprep.subr.bf16.mxu0 0
    %160 = vmatpush2.bf16.msra.mxu0 0
    %161 = vmatprep.subr.bf16.mxu0 0
    %162 = vmatpush2.bf16.msra.mxu0 0
    %163 = vmatprep.subr.bf16.mxu0 0
    %164 = vmatpush2.bf16.msra.mxu0 0
    %165 = vmatprep.mubr.bf16.mxu0 0
    %166 = vmatmul.mubr.bf16.gmra.mxu0 %v61
    %v167 = vpop.f32.mrf.mxu0
    %v168 = vadd.f32 %v83, %v167
    %v169 = vpop.f32.mrf.mxu0
    %v170 = vpop.f32.mrf.mxu0
    %v171 = vpop.f32.mrf.mxu0
    %172 = vdwg.mxu0
    %v173 = vmax.f32 %v168, 0.0
    %v174 = vpack.c.bf16 %v173, %v173
    %v175 = vld [vmem:[#allocation7] sm:$0xf]
    %v176 = vld [vmem:[#allocation7 + $0x4] sm:$0xf]
    %v177 = vld [vmem:[#allocation7 + $0x8] sm:$0xf]
    %v178 = vld [vmem:[#allocation7 + $0xc] sm:$0xf]
    %v179 = vld [vmem:[#allocation7 + $0x10] sm:$0xf]
    %v180 = vld [vmem:[#allocation7 + $0x14] sm:$0xf]
    %v181 = vld [vmem:[#allocation7 + $0x18] sm:$0xf]
    %v182 = vld [vmem:[#allocation7 + $0x1c] sm:$0xf]
    %v183 = vld [vmem:[#allocation7 + $0x20] sm:$0xf]
    %v184 = vld [vmem:[#allocation7 + $0x24] sm:$0xf]
    %v185 = vld [vmem:[#allocation7 + $0x28] sm:$0xf]
    %v186 = vld [vmem:[#allocation7 + $0x2c] sm:$0xf]
    %v187 = vld [vmem:[#allocation7 + $0x30] sm:$0xf]
    %v188 = vld [vmem:[#allocation7 + $0x34] sm:$0xf]
    %v189 = vld [vmem:[#allocation7 + $0x38] sm:$0xf]
    %v190 = vld [vmem:[#allocation7 + $0x3c] sm:$0xf]
    %v191 = vld [vmem:[%s4] sm:$0x1]
    %v193 = vlaneseq
    %v194 = vshrl.u32 %v193, 7
    %v195 = vsub.s32 0, %v194
    %v196 = vrot.slane %v191, %v195
    %v214 = vunpack.c.l.b16 %v175
    %v215 = vunpack.c.l.b16 %v176
    %v216 = vunpack.c.l.b16 %v177
    %v217 = vunpack.c.l.b16 %v178
    %v218 = vunpack.c.l.b16 %v179
    %v219 = vunpack.c.l.b16 %v180
    %v220 = vunpack.c.l.b16 %v181
    %v221 = vunpack.c.l.b16 %v182
    %v222 = vunpack.c.l.b16 %v183
    %v223 = vunpack.c.l.b16 %v184
    %v224 = vunpack.c.l.b16 %v185
    %v225 = vunpack.c.l.b16 %v186
    %v226 = vunpack.c.l.b16 %v187
    %v227 = vunpack.c.l.b16 %v188
    %v228 = vunpack.c.l.b16 %v189
    %v229 = vunpack.c.l.b16 %v190
    %v230 = vpack.c.b16 %v215, %v214
    %v231 = vpack.c.b16 %v217, %v216
    %v232 = vpack.c.b16 %v219, %v218
    %v233 = vpack.c.b16 %v221, %v220
    %v234 = vpack.c.b16 %v223, %v222
    %v235 = vpack.c.b16 %v225, %v224
    %v236 = vpack.c.b16 %v227, %v226
    %v237 = vpack.c.b16 %v229, %v228
    %246 = vmatprep.subr.bf16.mxu0 0
    %247 = vmatpush1.bf16.msra.mxu0 %v237
    %248 = vmatprep.subr.bf16.mxu0 0
    %249 = vmatpush1.bf16.msra.mxu0 %v236
    %250 = vmatprep.subr.bf16.mxu0 0
    %251 = vmatpush1.bf16.msra.mxu0 %v235
    %252 = vmatprep.subr.bf16.mxu0 0
    %253 = vmatpush1.bf16.msra.mxu0 %v234
    %254 = vmatprep.subr.bf16.mxu0 0
    %255 = vmatpush1.bf16.msra.mxu0 %v233
    %256 = vmatprep.subr.bf16.mxu0 0
    %257 = vmatpush1.bf16.msra.mxu0 %v232
    %258 = vmatprep.subr.bf16.mxu0 0
    %259 = vmatpush1.bf16.msra.mxu0 %v231
    %260 = vmatprep.subr.bf16.mxu0 0
    %261 = vmatpush1.bf16.msra.mxu0 %v230
    %262 = vmatprep.subr.bf16.mxu0 0
    %263 = vmatpush2.bf16.msra.mxu0 0
    %264 = vmatprep.subr.bf16.mxu0 0
    %265 = vmatpush2.bf16.msra.mxu0 0
    %266 = vmatprep.subr.bf16.mxu0 0
    %267 = vmatpush2.bf16.msra.mxu0 0
    %268 = vmatprep.subr.bf16.mxu0 0
    %269 = vmatpush2.bf16.msra.mxu0 0
    %270 = vmatprep.subr.bf16.mxu0 0
    %271 = vmatpush2.bf16.msra.mxu0 0
    %272 = vmatprep.subr.bf16.mxu0 0
    %273 = vmatpush2.bf16.msra.mxu0 0
    %274 = vmatprep.subr.bf16.mxu0 0
    %275 = vmatpush2.bf16.msra.mxu0 0
    %276 = vmatprep.subr.bf16.mxu0 0
    %277 = vmatpush2.bf16.msra.mxu0 0
    %278 = vmatprep.mubr.bf16.mxu0 0
    %279 = vmatmul.mubr.bf16.gmra.mxu0 %v174
    %v280 = vpop.f32.mrf.mxu0
    %v281 = vadd.f32 %v196, %v280
    %v282 = vpop.f32.mrf.mxu0
    %v283 = vpop.f32.mrf.mxu0
    %v284 = vpop.f32.mrf.mxu0
    %285 = vdwg.mxu0
    %v286 = vmax.f32 %v281, 0.0
    %287 = vst [vmem:[#allocation8] sm:$0xff] %v286
    // Predicated region
    $region34: #{tpu_custom_call.1} parent=1 // pred_check
      _
    $region35: #{tpu_custom_call.1} parent=1 // pred_check_branch
      %289 = sbr.rel (0) target = $region37
    $region36: #{tpu_custom_call.1} parent=1 // pred_region
      %s291 = ssub.s32 128, 128
      %292 = vsyncadd [#allocation4], %s291
      %s294 = sshll.u32 [#allocation8], 4
      %s295 = int_to_ptr.vmem [resolvable:$true] %s294
      %297 = dma.vmem_to_hbm [thread:$0]  %s295, 128, %s5, [#allocation4]
    $region37: #{tpu_custom_call.1} parent=1 // pred_fallthru
      _
    // Predicated region
    $region38: #{tpu_custom_call.1} parent=1 // pred_check
      _
    $region39: #{tpu_custom_call.1} parent=1 // pred_check_branch
      %299 = sbr.rel (0) target = $region41
    $region40: #{tpu_custom_call.1} parent=1 // pred_region
      %300 = dma.done [#allocation4], 128
    $region41: #{tpu_custom_call.1} parent=1 // pred_fallthru
      _
    %301 = vsyncpa [#allocation3], 1
    %302 = vsyncpa [#allocation6], 1
    %303 = vsyncpa [#allocation4], 1

// kernel: tpu_custom_call.1
$region0: #{tpu_custom_call.1}
  #allocation0 [shape = 'u32[]', space=smem, size = 0x4, offset = 0x4, fixed_abs, tag = 'smem constant byte address 0x4 - core index']
  #allocation1 [shape = 'u32[144,128]{1,0:T(1,128)}', space=vmem, size = 0x12000, scoped, tag = 'internal scratch']
  %s0 = inlined_call_operand.hbm [shape: bf16[8,128], index: 0, kind: input, shape index: {}]
  %s1 = inlined_call_operand.hbm [shape: bf16[128,128], index: 1, kind: input, shape index: {}]
  %s2 = inlined_call_operand.vmem [shape: f32[1,128], index: 2, kind: input, shape index: {}]
  %s3 = inlined_call_operand.hbm [shape: bf16[128,128], index: 3, kind: input, shape index: {}]
  %s4 = inlined_call_operand.vmem [shape: f32[1,128], index: 4, kind: input, shape index: {}]
  %s5 = inlined_call_operand.hbm [shape: f32[8,128], index: 5, kind: output, shape index: {}]
  %s6 = sld [smem:[#allocation0]]
  $region42: #{tpu_custom_call.1} parent=0
    _
  %s8 = ssub.s32 1, %s6
  %s9 = scalar_select 0, %s8, %s6
  $region1: #{tpu_custom_call.1} parent=0
    #allocation2 [shape = 'u8[2048]{0}', space=vmem, size = 0x800, scoped, tag = 'input window, operand 0, single buffered']
    #allocation3 [shape = 's32[1]{0}', space=sflag, size = 0x4, scoped, tag = 'scoped memory for tpu_custom_call.1']
    #allocation4 [shape = 's32[1]{0}', space=sflag, size = 0x4, scoped, tag = 'scoped memory for tpu_custom_call.1']
    #allocation5 [shape = 'u8[32768]{0}', space=vmem, size = 0x8000, scoped, tag = 'input window, operand 1, single buffered']
    #allocation6 [shape = 's32[1]{0}', space=sflag, size = 0x4, scoped, tag = 'scoped memory for tpu_custom_call.1']
    #allocation7 [shape = 'u8[32768]{0}', space=vmem, size = 0x8000, scoped, tag = 'input window, operand 3, single buffered']
    #allocation8 [shape = 'u8[4096]{0}', space=vmem, size = 0x1000, scoped, tag = 'output window, operand 0, single buffered']
    %10 = vsyncpa [#allocation3], 0
    %11 = vsyncpa [#allocation6], 0
    %12 = vsyncpa [#allocation4], 0
    // Predicated region
    $region2: #{tpu_custom_call.1} parent=1 // pred_check
      _
    $region3: #{tpu_custom_call.1} parent=1 // pred_check_branch
      %14 = sbr.rel (0) target = $region5
    $region4: #{tpu_custom_call.1} parent=1 // pred_region
      %s16 = ssub.s32 64, 64
      %17 = vsyncadd [#allocation3], %s16
      %s19 = sshll.u32 [#allocation2], 4
      %s20 = int_to_ptr.vmem [resolvable:$true] %s19
      %22 = dma.hbm_to_vmem [thread:$0]  %s0, 64, %s20, [#allocation3]
    $region5: #{tpu_custom_call.1} parent=1 // pred_fallthru
      _
    // Predicated region
    $region6: #{tpu_custom_call.1} parent=1 // pred_check
      _
    $region7: #{tpu_custom_call.1} parent=1 // pred_check_branch
      %24 = sbr.rel (0) target = $region9
    $region8: #{tpu_custom_call.1} parent=1 // pred_region
      %s26 = ssub.s32 1024, 1024
      %27 = vsyncadd [#allocation6], %s26
      %s28 = sshll.u32 [#allocation5], 4
      %s29 = int_to_ptr.vmem [resolvable:$true] %s28
      %34 = dma.hbm_to_vmem [thread:$0]  %s1, 1024, %s29, [#allocation6], 64, 64, 4
    $region9: #{tpu_custom_call.1} parent=1 // pred_fallthru
      _
    // Predicated region
    $region10: #{tpu_custom_call.1} parent=1 // pred_check
      _
    $region11: #{tpu_custom_call.1} parent=1 // pred_check_branch
      %36 = sbr.rel (0) target = $region13
    $region12: #{tpu_custom_call.1} parent=1 // pred_region
      _
    $region13: #{tpu_custom_call.1} parent=1 // pred_fallthru
      _
    // Predicated region
    $region14: #{tpu_custom_call.1} parent=1 // pred_check
      _
    $region15: #{tpu_custom_call.1} parent=1 // pred_check_branch
      %38 = sbr.rel (0) target = $region17
    $region16: #{tpu_custom_call.1} parent=1 // pred_region
      %s40 = ssub.s32 1024, 1024
      %41 = vsyncadd [#allocation6], %s40
      %s42 = sshll.u32 [#allocation7], 4
      %s43 = int_to_ptr.vmem [resolvable:$true] %s42
      %48 = dma.hbm_to_vmem [thread:$0]  %s3, 1024, %s43, [#allocation6], 64, 64, 4
    $region17: #{tpu_custom_call.1} parent=1 // pred_fallthru
      _
    // Predicated region
    $region18: #{tpu_custom_call.1} parent=1 // pred_check
      _
    $region19: #{tpu_custom_call.1} parent=1 // pred_check_branch
      %50 = sbr.rel (0) target = $region21
    $region20: #{tpu_custom_call.1} parent=1 // pred_region
      _
    $region21: #{tpu_custom_call.1} parent=1 // pred_fallthru
      _
    // Predicated region
    $region22: #{tpu_custom_call.1} parent=1 // pred_check
      _
    $region23: #{tpu_custom_call.1} parent=1 // pred_check_branch
      %52 = sbr.rel (0) target = $region25
    $region24: #{tpu_custom_call.1} parent=1 // pred_region
      %53 = dma.done [#allocation3], 64
    $region25: #{tpu_custom_call.1} parent=1 // pred_fallthru
      _
    // Predicated region
    $region26: #{tpu_custom_call.1} parent=1 // pred_check
      _
    $region27: #{tpu_custom_call.1} parent=1 // pred_check_branch
      %55 = sbr.rel (0) target = $region29
    $region28: #{tpu_custom_call.1} parent=1 // pred_region
      %56 = dma.done [#allocation6], 1024
    $region29: #{tpu_custom_call.1} parent=1 // pred_fallthru
      _
    // Predicated region
    $region30: #{tpu_custom_call.1} parent=1 // pred_check
      _
    $region31: #{tpu_custom_call.1} parent=1 // pred_check_branch
      %58 = sbr.rel (0) target = $region33
    $region32: #{tpu_custom_call.1} parent=1 // pred_region
      %59 = dma.done [#allocation6], 1024
    $region33: #{tpu_custom_call.1} parent=1 // pred_fallthru
      _
    %v61 = vld [vmem:[#allocation2] sm:$0xf]
    %v62 = vld [vmem:[#allocation5] sm:$0xf]
    %v63 = vld [vmem:[#allocation5 + $0x4] sm:$0xf]
    %v64 = vld [vmem:[#allocation5 + $0x8] sm:$0xf]
    %v65 = vld [vmem:[#allocation5 + $0xc] sm:$0xf]
    %v66 = vld [vmem:[#allocation5 + $0x10] sm:$0xf]
    %v67 = vld [vmem:[#allocation5 + $0x14] sm:$0xf]
    %v68 = vld [vmem:[#allocation5 + $0x18] sm:$0xf]
    %v69 = vld [vmem:[#allocation5 + $0x1c] sm:$0xf]
    %v70 = vld [vmem:[#allocation5 + $0x20] sm:$0xf]
    %v71 = vld [vmem:[#allocation5 + $0x24] sm:$0xf]
    %v72 = vld [vmem:[#allocation5 + $0x28] sm:$0xf]
    %v73 = vld [vmem:[#allocation5 + $0x2c] sm:$0xf]
    %v74 = vld [vmem:[#allocation5 + $0x30] sm:$0xf]
    %v75 = vld [vmem:[#allocation5 + $0x34] sm:$0xf]
    %v76 = vld [vmem:[#allocation5 + $0x38] sm:$0xf]
    %v77 = vld [vmem:[#allocation5 + $0x3c] sm:$0xf]
    %v78 = vld [vmem:[%s2] sm:$0x1]
    %v80 = vlaneseq
    %v81 = vshrl.u32 %v80, 7
    %v82 = vsub.s32 0, %v81
    %v83 = vrot.slane %v78, %v82
    %v101 = vunpack.c.l.b16 %v62
    %v102 = vunpack.c.l.b16 %v63
    %v103 = vunpack.c.l.b16 %v64
    %v104 = vunpack.c.l.b16 %v65
    %v105 = vunpack.c.l.b16 %v66
    %v106 = vunpack.c.l.b16 %v67
    %v107 = vunpack.c.l.b16 %v68
    %v108 = vunpack.c.l.b16 %v69
    %v109 = vunpack.c.l.b16 %v70
    %v110 = vunpack.c.l.b16 %v71
    %v111 = vunpack.c.l.b16 %v72
    %v112 = vunpack.c.l.b16 %v73
    %v113 = vunpack.c.l.b16 %v74
    %v114 = vunpack.c.l.b16 %v75
    %v115 = vunpack.c.l.b16 %v76
    %v116 = vunpack.c.l.b16 %v77
    %v117 = vpack.c.b16 %v102, %v101
    %v118 = vpack.c.b16 %v104, %v103
    %v119 = vpack.c.b16 %v106, %v105
    %v120 = vpack.c.b16 %v108, %v107
    %v121 = vpack.c.b16 %v110, %v109
    %v122 = vpack.c.b16 %v112, %v111
    %v123 = vpack.c.b16 %v114, %v113
    %v124 = vpack.c.b16 %v116, %v115
    %133 = vmatprep.subr.bf16.mxu0 0
    %134 = vmatpush1.bf16.msra.mxu0 %v124
    %135 = vmatprep.subr.bf16.mxu0 0
    %136 = vmatpush1.bf16.msra.mxu0 %v123
    %137 = vmatprep.subr.bf16.mxu0 0
    %138 = vmatpush1.bf16.msra.mxu0 %v122
    %139 = vmatprep.subr.bf16.mxu0 0
    %140 = vmatpush1.bf16.msra.mxu0 %v121
    %141 = vmatprep.subr.bf16.mxu0 0
    %142 = vmatpush1.bf16.msra.mxu0 %v120
    %143 = vmatprep.subr.bf16.mxu0 0
    %144 = vmatpush1.bf16.msra.mxu0 %v119
    %145 = vmatprep.subr.bf16.mxu0 0
    %146 = vmatpush1.bf16.msra.mxu0 %v118
    %147 = vmatprep.subr.bf16.mxu0 0
    %148 = vmatpush1.bf16.msra.mxu0 %v117
    %149 = vmatprep.subr.bf16.mxu0 0
    %150 = vmatpush2.bf16.msra.mxu0 0
    %151 = vmatprep.subr.bf16.mxu0 0
    %152 = vmatpush2.bf16.msra.mxu0 0
    %153 = vmatprep.subr.bf16.mxu0 0
    %154 = vmatpush2.bf16.msra.mxu0 0
    %155 = vmatprep.subr.bf16.mxu0 0
    %156 = vmatpush2.bf16.msra.mxu0 0
    %157 = vmatprep.subr.bf16.mxu0 0
    %158 = vmatpush2.bf16.msra.mxu0 0
    %159 = vmatprep.subr.bf16.mxu0 0
    %160 = vmatpush2.bf16.msra.mxu0 0
    %161 = vmatprep.subr.bf16.mxu0 0
    %162 = vmatpush2.bf16.msra.mxu0 0
    %163 = vmatprep.subr.bf16.mxu0 0
    %164 = vmatpush2.bf16.msra.mxu0 0
    %165 = vmatprep.mubr.bf16.mxu0 0
    %166 = vmatmul.mubr.bf16.gmra.mxu0 %v61
    %v167 = vpop.f32.mrf.mxu0
    %v168 = vadd.f32 %v83, %v167
    %v169 = vpop.f32.mrf.mxu0
    %v170 = vpop.f32.mrf.mxu0
    %v171 = vpop.f32.mrf.mxu0
    %172 = vdwg.mxu0
    %v173 = vmax.f32 %v168, 0.0
    %v174 = vpack.c.bf16 %v173, %v173
    %v175 = vld [vmem:[#allocation7] sm:$0xf]
    %v176 = vld [vmem:[#allocation7 + $0x4] sm:$0xf]
    %v177 = vld [vmem:[#allocation7 + $0x8] sm:$0xf]
    %v178 = vld [vmem:[#allocation7 + $0xc] sm:$0xf]
    %v179 = vld [vmem:[#allocation7 + $0x10] sm:$0xf]
    %v180 = vld [vmem:[#allocation7 + $0x14] sm:$0xf]
    %v181 = vld [vmem:[#allocation7 + $0x18] sm:$0xf]
    %v182 = vld [vmem:[#allocation7 + $0x1c] sm:$0xf]
    %v183 = vld [vmem:[#allocation7 + $0x20] sm:$0xf]
    %v184 = vld [vmem:[#allocation7 + $0x24] sm:$0xf]
    %v185 = vld [vmem:[#allocation7 + $0x28] sm:$0xf]
    %v186 = vld [vmem:[#allocation7 + $0x2c] sm:$0xf]
    %v187 = vld [vmem:[#allocation7 + $0x30] sm:$0xf]
    %v188 = vld [vmem:[#allocation7 + $0x34] sm:$0xf]
    %v189 = vld [vmem:[#allocation7 + $0x38] sm:$0xf]
    %v190 = vld [vmem:[#allocation7 + $0x3c] sm:$0xf]
    %v191 = vld [vmem:[%s4] sm:$0x1]
    %v193 = vlaneseq
    %v194 = vshrl.u32 %v193, 7
    %v195 = vsub.s32 0, %v194
    %v196 = vrot.slane %v191, %v195
    %v214 = vunpack.c.l.b16 %v175
    %v215 = vunpack.c.l.b16 %v176
    %v216 = vunpack.c.l.b16 %v177
    %v217 = vunpack.c.l.b16 %v178
    %v218 = vunpack.c.l.b16 %v179
    %v219 = vunpack.c.l.b16 %v180
    %v220 = vunpack.c.l.b16 %v181
    %v221 = vunpack.c.l.b16 %v182
    %v222 = vunpack.c.l.b16 %v183
    %v223 = vunpack.c.l.b16 %v184
    %v224 = vunpack.c.l.b16 %v185
    %v225 = vunpack.c.l.b16 %v186
    %v226 = vunpack.c.l.b16 %v187
    %v227 = vunpack.c.l.b16 %v188
    %v228 = vunpack.c.l.b16 %v189
    %v229 = vunpack.c.l.b16 %v190
    %v230 = vpack.c.b16 %v215, %v214
    %v231 = vpack.c.b16 %v217, %v216
    %v232 = vpack.c.b16 %v219, %v218
    %v233 = vpack.c.b16 %v221, %v220
    %v234 = vpack.c.b16 %v223, %v222
    %v235 = vpack.c.b16 %v225, %v224
    %v236 = vpack.c.b16 %v227, %v226
    %v237 = vpack.c.b16 %v229, %v228
    %246 = vmatprep.subr.bf16.mxu0 0
    %247 = vmatpush1.bf16.msra.mxu0 %v237
    %248 = vmatprep.subr.bf16.mxu0 0
    %249 = vmatpush1.bf16.msra.mxu0 %v236
    %250 = vmatprep.subr.bf16.mxu0 0
    %251 = vmatpush1.bf16.msra.mxu0 %v235
    %252 = vmatprep.subr.bf16.mxu0 0
    %253 = vmatpush1.bf16.msra.mxu0 %v234
    %254 = vmatprep.subr.bf16.mxu0 0
    %255 = vmatpush1.bf16.msra.mxu0 %v233
    %256 = vmatprep.subr.bf16.mxu0 0
    %257 = vmatpush1.bf16.msra.mxu0 %v232
    %258 = vmatprep.subr.bf16.mxu0 0
    %259 = vmatpush1.bf16.msra.mxu0 %v231
    %260 = vmatprep.subr.bf16.mxu0 0
    %261 = vmatpush1.bf16.msra.mxu0 %v230
    %262 = vmatprep.subr.bf16.mxu0 0
    %263 = vmatpush2.bf16.msra.mxu0 0
    %264 = vmatprep.subr.bf16.mxu0 0
    %265 = vmatpush2.bf16.msra.mxu0 0
    %266 = vmatprep.subr.bf16.mxu0 0
    %267 = vmatpush2.bf16.msra.mxu0 0
    %268 = vmatprep.subr.bf16.mxu0 0
    %269 = vmatpush2.bf16.msra.mxu0 0
    %270 = vmatprep.subr.bf16.mxu0 0
    %271 = vmatpush2.bf16.msra.mxu0 0
    %272 = vmatprep.subr.bf16.mxu0 0
    %273 = vmatpush2.bf16.msra.mxu0 0
    %274 = vmatprep.subr.bf16.mxu0 0
    %275 = vmatpush2.bf16.msra.mxu0 0
    %276 = vmatprep.subr.bf16.mxu0 0
    %277 = vmatpush2.bf16.msra.mxu0 0
    %278 = vmatprep.mubr.bf16.mxu0 0
    %279 = vmatmul.mubr.bf16.gmra.mxu0 %v174
    %v280 = vpop.f32.mrf.mxu0
    %v281 = vadd.f32 %v196, %v280
    %v282 = vpop.f32.mrf.mxu0
    %v283 = vpop.f32.mrf.mxu0
    %v284 = vpop.f32.mrf.mxu0
    %285 = vdwg.mxu0
    %v286 = vmax.f32 %v281, 0.0
    %287 = vst [vmem:[#allocation8] sm:$0xff] %v286
    // Predicated region
    $region34: #{tpu_custom_call.1} parent=1 // pred_check
      _
    $region35: #{tpu_custom_call.1} parent=1 // pred_check_branch
      %289 = sbr.rel (0) target = $region37
    $region36: #{tpu_custom_call.1} parent=1 // pred_region
      %s291 = ssub.s32 128, 128
      %292 = vsyncadd [#allocation4], %s291
      %s294 = sshll.u32 [#allocation8], 4
      %s295 = int_to_ptr.vmem [resolvable:$true] %s294
      %297 = dma.vmem_to_hbm [thread:$0]  %s295, 128, %s5, [#allocation4]
    $region37: #{tpu_custom_call.1} parent=1 // pred_fallthru
      _
    // Predicated region
    $region38: #{tpu_custom_call.1} parent=1 // pred_check
      _
    $region39: #{tpu_custom_call.1} parent=1 // pred_check_branch
      %299 = sbr.rel (0) target = $region41
    $region40: #{tpu_custom_call.1} parent=1 // pred_region
      %300 = dma.done [#allocation4], 128
    $region41: #{tpu_custom_call.1} parent=1 // pred_fallthru
      _
    %301 = vsyncpa [#allocation3], 1
    %302 = vsyncpa [#allocation6], 1
    %303 = vsyncpa [#allocation4], 1

</llo_original>
